<compile_context>
chip_gen: v5e
topology: v5e:2x2
jax: 0.10.0
libtpu: 0.0.40
codegen_flags: <defaults>
</compile_context>

<pallas_src>
import functools

import jax
import jax.numpy as jnp
from jax.experimental import pallas as pl
from jax.experimental.pallas import tpu as pltpu


# ----------------------------- fused Pallas kernel ---------------------------

def _multibranch_fused_kernel(act_ref, w_ref, b_ref, wconv_ref, out_ref, *,
                              num_heads, n_batch, t_len, e_attn, e_conv,
                              conv_k, need_weights):
    """Single grid step (grid=()) computing both branches for all rows.

    act_ref lanes: [ k_attn(E1) | v_attn(E1) | q_attn(E1) | q_conv(E2) |
                     conv_keep(1) | attn_bias(B*T) | shift_keep(K-1) ]
    w_ref rows:    [ 0:3E1  -> block q/k/v projection (outputs [qp|kp|vp]),
                     3E1:4E1 -> out-projection wo in cols 0:E1 ]
    b_ref lanes:   [ bq*scale | bk | bv | bo ]
    out_ref lanes: [ x_attn(E1) | conv(E2) | attn_weights(S, if need_weights) ]
    """
    H, B, T = num_heads, n_batch, t_len
    E1, E2, K = e_attn, e_conv, conv_k
    Dh = E1 // H
    BT = B * T
    S = T

    o_q_conv = 3 * E1
    o_keep = o_q_conv + E2
    o_bias = o_keep + 1
    o_shift = o_bias + BT

    act = act_ref[...]                                    # (BT, lanes)

    # ---- fused q/k/v projection: ONE MXU matmul via the block weight slab ---
    # (q-scaling already folded into the q block and its bias by the wrapper)
    proj = jnp.dot(act[:, 0:3 * E1], w_ref[0:3 * E1, :],
                   preferred_element_type=jnp.float32) + b_ref[:, 0:3 * E1]
    qp = proj[:, 0:E1]                                    # (BT, E1)
    kp = proj[:, E1:2 * E1]
    vp = proj[:, 2 * E1:3 * E1]

    attn_bias = act[:, o_bias:o_bias + BT]                # (BT, BT) additive mask

    # ---- attention core: all (batch, target) rows at once, loop over heads --
    ctx_heads = []
    if need_weights:
        attn_sum = jnp.zeros((BT, BT), jnp.float32)
    for h in range(H):                                    # static unroll (H=4)
        c0 = h * Dh
        # scores over the whole (B*T, B*T) row/key grid in ONE matmul per head;
        # the additive bias kills cross-batch blocks (-2e30) and padded keys
        # (-1e30) — both underflow to exactly 0 after the softmax.
        s = jax.lax.dot_general(qp[:, c0:c0 + Dh], kp[:, c0:c0 + Dh],
                                (((1,), (1,)), ((), ())),
                                preferred_element_type=jnp.float32)
        s = s + attn_bias
        s = s - jnp.max(s, axis=-1, keepdims=True)
        p = jnp.exp(s)
        # exact per-row divide (only BT scalars on the EUP) so the exported
        # attention weights sum to 1 to f32 precision.
        p = p * (1.0 / jnp.sum(p, axis=-1, keepdims=True))
        ctx_heads.append(jnp.dot(p, vp[:, c0:c0 + Dh],
                                 preferred_element_type=jnp.float32))
        if need_weights:
            attn_sum = attn_sum + p

    # single out-projection matmul over all rows (head concat kept for that).
    ctx = jnp.concatenate(ctx_heads, axis=-1)             # (BT, E1)
    x_attn = jnp.dot(ctx, w_ref[3 * E1:4 * E1, 0:E1],
                     preferred_element_type=jnp.float32) + b_ref[:, 3 * E1:4 * E1]

    # ---- lightweight depthwise causal conv branch, all rows at once ---------
    wr = wconv_ref[...]                                   # (K, E2)
    wr = wr - jnp.max(wr, axis=0, keepdims=True)          # weight_softmax
    we = jnp.exp(wr)
    w_sm = we * (1.0 / jnp.sum(we, axis=0, keepdims=True))

    xc = act[:, o_q_conv:o_q_conv + E2] * act[:, o_keep:o_keep + 1]  # masked q
    acc = xc * w_sm[K - 1:K, :]                           # tap K-1 <-> shift 0
    for sft in range(1, K):                               # static unroll (K-1)
        # sublane roll over the whole (B*T) slab; rows that would leak across
        # the batch boundary are zeroed by the precomputed shift-keep lane.
        xs = pltpu.roll(xc, sft, axis=0) * act[:, o_shift + sft - 1:o_shift + sft]
        acc = acc + xs * w_sm[K - 1 - sft:K - sft, :]

    # ---- direct lane-slice stores into the single merged output -------------
    out_ref[:, 0:E1] = x_attn.astype(out_ref.dtype)
    out_ref[:, E1:E1 + E2] = acc.astype(out_ref.dtype)
    if need_weights:
        # fold the key axis over batch blocks (cross-batch entries are exactly
        # 0), then average over heads.
        attn_fold = jnp.zeros((BT, S), jnp.float32)
        for bb in range(B):
            attn_fold = attn_fold + attn_sum[:, bb * S:(bb + 1) * S]
        out_ref[:, E1 + E2:] = (attn_fold * (1.0 / H)).astype(out_ref.dtype)


# ---------------------------- MultiBranch forward ----------------------------

def multibranch_forward(query, key, value, key_padding_mask,
                        branch_types, branch_params, embed_dim_list,
                        need_weights=True):
    """query/key/value: (T, B, E) time-major.  Returns ((B, T, E), (B, T, S))."""
    T, B, E = query.shape
    assert sum(embed_dim_list) == E
    assert list(branch_types) == ["mha", "conv"], \
        "fused kernel is specialised to the [mha, conv] branch configuration"
    mha_p, conv_p = branch_params
    E1, E2 = embed_dim_list
    S = key.shape[0]
    assert S == T, "packed batch-block layout assumes tgt_len == src_len"

    H = mha_p["num_heads"]
    Dh = E1 // H
    scaling = Dh ** -0.5
    K = conv_p["weight"].shape[0]
    BT = B * T
    f32 = jnp.float32

    # -------- layout plumbing + operand packing (wrapper-side only) ----------
    q2 = jnp.transpose(query, (1, 0, 2)).reshape(BT, E).astype(f32)
    k2 = jnp.transpose(key, (1, 0, 2)).reshape(B * S, E).astype(f32)
    v2 = jnp.transpose(value, (1, 0, 2)).reshape(B * S, E).astype(f32)

    if key_padding_mask is None:
        kpm = jnp.zeros((B, S), f32)
    else:
        kpm = key_padding_mask.astype(f32)
    kpm_flat = kpm.reshape(BT)

    # additive attention bias: -2e30 for cross-batch blocks, -1e30 padded keys.
    blk = jnp.arange(BT) // T
    same_block = blk[:, None] == blk[None, :]
    attn_bias = jnp.where(same_block,
                          jnp.where(kpm_flat[None, :] > 0.5, -1e30, 0.0),
                          -2e30).astype(f32)                       # (BT, BT)

    keep = (1.0 - kpm_flat).reshape(BT, 1)                         # conv keep
    t_loc = jnp.arange(BT) % T
    shift_keep = (t_loc[:, None] >= jnp.arange(1, K)[None, :]).astype(f32)

    # activation + mask slab (one DMA).
    act = jnp.concatenate([k2[:, :E1], v2[:, :E1], q2,
                           keep, attn_bias, shift_keep], axis=1)

    # block weight slab: one matmul produces [qp | kp | vp]; q-scaling folded.
    W = jnp.zeros((4 * E1, 3 * E1), f32)
    W = W.at[0:E1, E1:2 * E1].set(mha_p["wk"].astype(f32))          # k -> kp
    W = W.at[E1:2 * E1, 2 * E1:3 * E1].set(mha_p["wv"].astype(f32))  # v -> vp
    W = W.at[2 * E1:3 * E1, 0:E1].set(mha_p["wq"].astype(f32) * scaling)  # q -> qp
    W = W.at[3 * E1:4 * E1, 0:E1].set(mha_p["wo"].astype(f32))      # out proj

    bias = jnp.concatenate([mha_p["bq"].astype(f32) * scaling,
                            mha_p["bk"].astype(f32),
                            mha_p["bv"].astype(f32),
                            mha_p["bo"].astype(f32)]).reshape(1, 4 * E1)

    wconv = conv_p["weight"].astype(f32)

    out_w = E + (S if need_weights else 0)
    kernel = functools.partial(
        _multibranch_fused_kernel,
        num_heads=H, n_batch=B, t_len=T, e_attn=E1, e_conv=E2, conv_k=K,
        need_weights=need_weights)

    # Single pallas_call, grid=(): the whole problem (a few KiB) lives in VMEM
    # in one step — no per-(b,h) grid, no intermediate HBM round trips, one
    # merged output buffer.
    res = pl.pallas_call(
        kernel,
        out_shape=jax.ShapeDtypeStruct((BT, out_w), f32),
    )(act, W, bias, wconv)

    out = res[:, :E].reshape(B, T, E).astype(query.dtype)
    attn = res[:, E:].reshape(B, T, S) if need_weights else None
    return out, attn


# ------------------------- pure-JAX reference (for checks) -------------------

def multibranch_reference(query, key, value, key_padding_mask,
                          mha_p, conv_p, embed_dim_list):
    T, B, E = query.shape
    E1, E2 = embed_dim_list
    H = mha_p["num_heads"]
    Dh = E1 // H
    scale = Dh ** -0.5
    K = conv_p["weight"].shape[0]
    hi = jax.lax.Precision.HIGHEST

    q, k, v = query[..., :E1], key[..., :E1], value[..., :E1]
    qp = (jnp.einsum("tbe,ef->tbf", q, mha_p["wq"], precision=hi)
          + mha_p["bq"]) * scale
    kp = jnp.einsum("tbe,ef->tbf", k, mha_p["wk"], precision=hi) + mha_p["bk"]
    vp = jnp.einsum("tbe,ef->tbf", v, mha_p["wv"], precision=hi) + mha_p["bv"]

    def heads(x):  # (T,B,E1) -> (B,H,T,Dh)
        return x.reshape(T, B, H, Dh).transpose(1, 2, 0, 3)

    qh, kh, vh = heads(qp), heads(kp), heads(vp)
    s = jnp.einsum("bhtd,bhsd->bhts", qh, kh, precision=hi)
    if key_padding_mask is not None:
        s = jnp.where(key_padding_mask[:, None, None, :], -1e30, s)
    p = jax.nn.softmax(s, axis=-1)
    ctx = jnp.einsum("bhts,bhsd->bhtd", p, vh, precision=hi)
    ctx = ctx.transpose(0, 2, 1, 3).reshape(B, T, E1)
    x_attn = jnp.einsum("bte,ef->btf", ctx, mha_p["wo"], precision=hi) + mha_p["bo"]
    attn = jnp.mean(p, axis=1)                                  # (B, T, S)

    qc = query[..., E1:]
    if key_padding_mask is not None:
        qc = jnp.where(key_padding_mask.T[:, :, None], 0.0, qc)
    xbt = jnp.transpose(qc, (1, 0, 2))                          # (B, T, E2)
    w = jax.nn.softmax(conv_p["weight"], axis=0)
    y = jnp.zeros_like(xbt)
    for kk in range(K):
        shift = K - 1 - kk
        xs = jnp.pad(xbt, ((0, 0), (shift, 0), (0, 0)))[:, :T, :]
        y = y + xs * w[kk]
    return jnp.concatenate([x_attn, y], axis=-1), attn


# ------------------------------------ main -----------------------------------

if __name__ == "__main__":
    T, B = 8, 2
    embed_dim_list = [16, 16]
    E = sum(embed_dim_list)
    H, K = 4, 3
    E1, E2 = embed_dim_list

    root = jax.random.PRNGKey(0)
    ks = jax.random.split(root, 12)

    query = jax.random.normal(ks[0], (T, B, E), jnp.float32)
    key_in = jax.random.normal(ks[1], (T, B, E), jnp.float32)
    value = jax.random.normal(ks[2], (T, B, E), jnp.float32)
    key_padding_mask = jnp.zeros((B, T), bool).at[1, 6:].set(True)

    mha_params = {
        "num_heads": H,
        "wq": 0.1 * jax.random.normal(ks[3], (E1, E1), jnp.float32),
        "wk": 0.1 * jax.random.normal(ks[4], (E1, E1), jnp.float32),
        "wv": 0.1 * jax.random.normal(ks[5], (E1, E1), jnp.float32),
        "wo": 0.1 * jax.random.normal(ks[6], (E1, E1), jnp.float32),
        "bq": 0.01 * jax.random.normal(ks[7], (E1,), jnp.float32),
        "bk": 0.01 * jax.random.normal(ks[8], (E1,), jnp.float32),
        "bv": 0.01 * jax.random.normal(ks[9], (E1,), jnp.float32),
        "bo": 0.01 * jax.random.normal(ks[10], (E1,), jnp.float32),
    }
    conv_params = {"weight": jax.random.normal(ks[11], (K, E2), jnp.float32)}

    branch_types = ["mha", "conv"]
    branch_params = [mha_params, conv_params]

    out, attn = multibranch_forward(query, key_in, value, key_padding_mask,
                                    branch_types, branch_params, embed_dim_list)
    out = jax.block_until_ready(out)
    attn = jax.block_until_ready(attn)

    assert out.shape == (B, T, E), out.shape
    assert attn.shape == (B, T, T), attn.shape
    assert bool(jnp.all(jnp.isfinite(out)))
    assert bool(jnp.all(jnp.isfinite(attn)))
    # softmax sanity: rows sum to ~1 (exact divide now), padded key positions
    # (batch 1, t >= 6) get exactly zero weight.
    assert bool(jnp.max(jnp.abs(jnp.sum(attn, axis=-1) - 1.0)) < 1e-3)
    assert bool(jnp.max(jnp.abs(attn[1, :, 6:])) < 1e-6)

    # numerical parity against a pure-JAX reference of the same forward pass.
    out_ref, attn_ref = multibranch_reference(query, key_in, value,
                                              key_padding_mask, mha_params,
                                              conv_params, embed_dim_list)
    out_ref = jax.block_until_ready(out_ref)
    assert bool(jnp.max(jnp.abs(out - out_ref)) < 2e-3), \
        float(jnp.max(jnp.abs(out - out_ref)))
    assert bool(jnp.max(jnp.abs(attn - attn_ref)) < 2e-3), \
        float(jnp.max(jnp.abs(attn - attn_ref)))
    print("KERNEL_OK")
</pallas_src>

<mosaic_0001>
module attributes {stable_mosaic.version = 11 : i64} {
  func.func @_multibranch_fused_kernel(%arg0: memref<16x83xf32, #tpu.memory_space<vmem>>, %arg1: memref<64x48xf32, #tpu.memory_space<vmem>>, %arg2: memref<1x64xf32, #tpu.memory_space<vmem>>, %arg3: memref<3x16xf32, #tpu.memory_space<vmem>>, %arg4: memref<16x40xf32, #tpu.memory_space<vmem>>) attributes {dimension_semantics = [], scalar_prefetch = 0 : i64, scratch_operands = 0 : i64, tpu.core_type = #tpu.core_type<tc>} {
    %c0 = arith.constant 0 : index
    %c0_0 = arith.constant 0 : index
    %0 = vector.load %arg0[%c0, %c0_0] : memref<16x83xf32, #tpu.memory_space<vmem>>, vector<16x83xf32>
    %1 = vector.extract_strided_slice %0 {offsets = [0, 0], sizes = [16, 48], strides = [1, 1]} : vector<16x83xf32> to vector<16x48xf32>
    %c0_1 = arith.constant 0 : index
    %c0_2 = arith.constant 0 : index
    %2 = vector.load %arg1[%c0_1, %c0_2] : memref<64x48xf32, #tpu.memory_space<vmem>>, vector<48x48xf32>
    %cst = arith.constant dense<0.000000e+00> : vector<16x48xf32>
    %3 = tpu.matmul %1, %2, %cst {dimension_numbers = #tpu.dot_dimension_numbers<[1], [0], [0], [1], [0, 0, 1, 1], [], []>} : vector<16x48xf32>, vector<48x48xf32>, vector<16x48xf32> -> vector<16x48xf32>
    %c0_3 = arith.constant 0 : index
    %c0_4 = arith.constant 0 : index
    %4 = vector.load %arg2[%c0_3, %c0_4] : memref<1x64xf32, #tpu.memory_space<vmem>>, vector<1x48xf32>
    %5 = vector.broadcast %4 : vector<1x48xf32> to vector<16x48xf32>
    %6 = arith.addf %3, %5 : vector<16x48xf32>
    %7 = vector.extract_strided_slice %6 {offsets = [0, 0], sizes = [16, 16], strides = [1, 1]} : vector<16x48xf32> to vector<16x16xf32>
    %8 = vector.extract_strided_slice %6 {offsets = [0, 16], sizes = [16, 16], strides = [1, 1]} : vector<16x48xf32> to vector<16x16xf32>
    %9 = vector.extract_strided_slice %6 {offsets = [0, 32], sizes = [16, 16], strides = [1, 1]} : vector<16x48xf32> to vector<16x16xf32>
    %10 = vector.extract_strided_slice %0 {offsets = [0, 65], sizes = [16, 16], strides = [1, 1]} : vector<16x83xf32> to vector<16x16xf32>
    %cst_5 = arith.constant 0.000000e+00 : f32
    %11 = vector.broadcast %cst_5 : f32 to vector<16x16xf32>
    %12 = vector.extract_strided_slice %7 {offsets = [0, 0], sizes = [16, 4], strides = [1, 1]} : vector<16x16xf32> to vector<16x4xf32>
    %13 = vector.extract_strided_slice %8 {offsets = [0, 0], sizes = [16, 4], strides = [1, 1]} : vector<16x16xf32> to vector<16x4xf32>
    %cst_6 = arith.constant dense<0.000000e+00> : vector<16x16xf32>
    %14 = tpu.matmul %12, %13, %cst_6 {dimension_numbers = #tpu.dot_dimension_numbers<[1], [1], [0], [0], [0, 0, 1, 0], [], []>} : vector<16x4xf32>, vector<16x4xf32>, vector<16x16xf32> -> vector<16x16xf32>
    %15 = arith.addf %14, %10 : vector<16x16xf32>
    %cst_7 = arith.constant dense<0xFF800000> : vector<16xf32>
    %16 = vector.multi_reduction <maximumf>, %15, %cst_7 [1] : vector<16x16xf32> to vector<16xf32>
    %17 = vector.shape_cast %16 : vector<16xf32> to vector<16x1xf32>
    %18 = vector.broadcast %17 : vector<16x1xf32> to vector<16x16xf32>
    %19 = arith.subf %15, %18 : vector<16x16xf32>
    %20 = math.exp %19 : vector<16x16xf32>
    %cst_8 = arith.constant dense<0.000000e+00> : vector<16xf32>
    %21 = vector.multi_reduction <add>, %20, %cst_8 [1] : vector<16x16xf32> to vector<16xf32>
    %22 = vector.shape_cast %21 : vector<16xf32> to vector<16x1xf32>
    %cst_9 = arith.constant 1.000000e+00 : f32
    %23 = vector.broadcast %cst_9 : f32 to vector<16x1xf32>
    %24 = arith.divf %23, %22 : vector<16x1xf32>
    %25 = vector.broadcast %24 : vector<16x1xf32> to vector<16x16xf32>
    %26 = arith.mulf %20, %25 : vector<16x16xf32>
    %27 = vector.extract_strided_slice %9 {offsets = [0, 0], sizes = [16, 4], strides = [1, 1]} : vector<16x16xf32> to vector<16x4xf32>
    %cst_10 = arith.constant dense<0.000000e+00> : vector<16x4xf32>
    %28 = tpu.matmul %26, %27, %cst_10 {dimension_numbers = #tpu.dot_dimension_numbers<[1], [0], [0], [1], [0, 0, 1, 1], [], []>} : vector<16x16xf32>, vector<16x4xf32>, vector<16x4xf32> -> vector<16x4xf32>
    %29 = arith.addf %11, %26 : vector<16x16xf32>
    %30 = vector.extract_strided_slice %7 {offsets = [0, 4], sizes = [16, 4], strides = [1, 1]} : vector<16x16xf32> to vector<16x4xf32>
    %31 = vector.extract_strided_slice %8 {offsets = [0, 4], sizes = [16, 4], strides = [1, 1]} : vector<16x16xf32> to vector<16x4xf32>
    %cst_11 = arith.constant dense<0.000000e+00> : vector<16x16xf32>
    %32 = tpu.matmul %30, %31, %cst_11 {dimension_numbers = #tpu.dot_dimension_numbers<[1], [1], [0], [0], [0, 0, 1, 0], [], []>} : vector<16x4xf32>, vector<16x4xf32>, vector<16x16xf32> -> vector<16x16xf32>
    %33 = arith.addf %32, %10 : vector<16x16xf32>
    %cst_12 = arith.constant dense<0xFF800000> : vector<16xf32>
    %34 = vector.multi_reduction <maximumf>, %33, %cst_12 [1] : vector<16x16xf32> to vector<16xf32>
    %35 = vector.shape_cast %34 : vector<16xf32> to vector<16x1xf32>
    %36 = vector.broadcast %35 : vector<16x1xf32> to vector<16x16xf32>
    %37 = arith.subf %33, %36 : vector<16x16xf32>
    %38 = math.exp %37 : vector<16x16xf32>
    %cst_13 = arith.constant dense<0.000000e+00> : vector<16xf32>
    %39 = vector.multi_reduction <add>, %38, %cst_13 [1] : vector<16x16xf32> to vector<16xf32>
    %40 = vector.shape_cast %39 : vector<16xf32> to vector<16x1xf32>
    %cst_14 = arith.constant 1.000000e+00 : f32
    %41 = vector.broadcast %cst_14 : f32 to vector<16x1xf32>
    %42 = arith.divf %41, %40 : vector<16x1xf32>
    %43 = vector.broadcast %42 : vector<16x1xf32> to vector<16x16xf32>
    %44 = arith.mulf %38, %43 : vector<16x16xf32>
    %45 = vector.extract_strided_slice %9 {offsets = [0, 4], sizes = [16, 4], strides = [1, 1]} : vector<16x16xf32> to vector<16x4xf32>
    %cst_15 = arith.constant dense<0.000000e+00> : vector<16x4xf32>
    %46 = tpu.matmul %44, %45, %cst_15 {dimension_numbers = #tpu.dot_dimension_numbers<[1], [0], [0], [1], [0, 0, 1, 1], [], []>} : vector<16x16xf32>, vector<16x4xf32>, vector<16x4xf32> -> vector<16x4xf32>
    %47 = arith.addf %29, %44 : vector<16x16xf32>
    %48 = vector.extract_strided_slice %7 {offsets = [0, 8], sizes = [16, 4], strides = [1, 1]} : vector<16x16xf32> to vector<16x4xf32>
    %49 = vector.extract_strided_slice %8 {offsets = [0, 8], sizes = [16, 4], strides = [1, 1]} : vector<16x16xf32> to vector<16x4xf32>
    %cst_16 = arith.constant dense<0.000000e+00> : vector<16x16xf32>
    %50 = tpu.matmul %48, %49, %cst_16 {dimension_numbers = #tpu.dot_dimension_numbers<[1], [1], [0], [0], [0, 0, 1, 0], [], []>} : vector<16x4xf32>, vector<16x4xf32>, vector<16x16xf32> -> vector<16x16xf32>
    %51 = arith.addf %50, %10 : vector<16x16xf32>
    %cst_17 = arith.constant dense<0xFF800000> : vector<16xf32>
    %52 = vector.multi_reduction <maximumf>, %51, %cst_17 [1] : vector<16x16xf32> to vector<16xf32>
    %53 = vector.shape_cast %52 : vector<16xf32> to vector<16x1xf32>
    %54 = vector.broadcast %53 : vector<16x1xf32> to vector<16x16xf32>
    %55 = arith.subf %51, %54 : vector<16x16xf32>
    %56 = math.exp %55 : vector<16x16xf32>
    %cst_18 = arith.constant dense<0.000000e+00> : vector<16xf32>
    %57 = vector.multi_reduction <add>, %56, %cst_18 [1] : vector<16x16xf32> to vector<16xf32>
    %58 = vector.shape_cast %57 : vector<16xf32> to vector<16x1xf32>
    %cst_19 = arith.constant 1.000000e+00 : f32
    %59 = vector.broadcast %cst_19 : f32 to vector<16x1xf32>
    %60 = arith.divf %59, %58 : vector<16x1xf32>
    %61 = vector.broadcast %60 : vector<16x1xf32> to vector<16x16xf32>
    %62 = arith.mulf %56, %61 : vector<16x16xf32>
    %63 = vector.extract_strided_slice %9 {offsets = [0, 8], sizes = [16, 4], strides = [1, 1]} : vector<16x16xf32> to vector<16x4xf32>
    %cst_20 = arith.constant dense<0.000000e+00> : vector<16x4xf32>
    %64 = tpu.matmul %62, %63, %cst_20 {dimension_numbers = #tpu.dot_dimension_numbers<[1], [0], [0], [1], [0, 0, 1, 1], [], []>} : vector<16x16xf32>, vector<16x4xf32>, vector<16x4xf32> -> vector<16x4xf32>
    %65 = arith.addf %47, %62 : vector<16x16xf32>
    %66 = vector.extract_strided_slice %7 {offsets = [0, 12], sizes = [16, 4], strides = [1, 1]} : vector<16x16xf32> to vector<16x4xf32>
    %67 = vector.extract_strided_slice %8 {offsets = [0, 12], sizes = [16, 4], strides = [1, 1]} : vector<16x16xf32> to vector<16x4xf32>
    %cst_21 = arith.constant dense<0.000000e+00> : vector<16x16xf32>
    %68 = tpu.matmul %66, %67, %cst_21 {dimension_numbers = #tpu.dot_dimension_numbers<[1], [1], [0], [0], [0, 0, 1, 0], [], []>} : vector<16x4xf32>, vector<16x4xf32>, vector<16x16xf32> -> vector<16x16xf32>
    %69 = arith.addf %68, %10 : vector<16x16xf32>
    %cst_22 = arith.constant dense<0xFF800000> : vector<16xf32>
    %70 = vector.multi_reduction <maximumf>, %69, %cst_22 [1] : vector<16x16xf32> to vector<16xf32>
    %71 = vector.shape_cast %70 : vector<16xf32> to vector<16x1xf32>
    %72 = vector.broadcast %71 : vector<16x1xf32> to vector<16x16xf32>
    %73 = arith.subf %69, %72 : vector<16x16xf32>
    %74 = math.exp %73 : vector<16x16xf32>
    %cst_23 = arith.constant dense<0.000000e+00> : vector<16xf32>
    %75 = vector.multi_reduction <add>, %74, %cst_23 [1] : vector<16x16xf32> to vector<16xf32>
    %76 = vector.shape_cast %75 : vector<16xf32> to vector<16x1xf32>
    %cst_24 = arith.constant 1.000000e+00 : f32
    %77 = vector.broadcast %cst_24 : f32 to vector<16x1xf32>
    %78 = arith.divf %77, %76 : vector<16x1xf32>
    %79 = vector.broadcast %78 : vector<16x1xf32> to vector<16x16xf32>
    %80 = arith.mulf %74, %79 : vector<16x16xf32>
    %81 = vector.extract_strided_slice %9 {offsets = [0, 12], sizes = [16, 4], strides = [1, 1]} : vector<16x16xf32> to vector<16x4xf32>
    %cst_25 = arith.constant dense<0.000000e+00> : vector<16x4xf32>
    %82 = tpu.matmul %80, %81, %cst_25 {dimension_numbers = #tpu.dot_dimension_numbers<[1], [0], [0], [1], [0, 0, 1, 1], [], []>} : vector<16x16xf32>, vector<16x4xf32>, vector<16x4xf32> -> vector<16x4xf32>
    %83 = arith.addf %65, %80 : vector<16x16xf32>
    %84 = tpu.concatenate %28, %46, %64, %82 in 1 : vector<16x4xf32>, vector<16x4xf32>, vector<16x4xf32>, vector<16x4xf32> -> vector<16x16xf32>
    %c48 = arith.constant 48 : index
    %c0_26 = arith.constant 0 : index
    %85 = vector.load %arg1[%c48, %c0_26] : memref<64x48xf32, #tpu.memory_space<vmem>>, vector<16x16xf32>
    %cst_27 = arith.constant dense<0.000000e+00> : vector<16x16xf32>
    %86 = tpu.matmul %84, %85, %cst_27 {dimension_numbers = #tpu.dot_dimension_numbers<[1], [0], [0], [1], [0, 0, 1, 1], [], []>} : vector<16x16xf32>, vector<16x16xf32>, vector<16x16xf32> -> vector<16x16xf32>
    %c0_28 = arith.constant 0 : index
    %c48_29 = arith.constant 48 : index
    %87 = vector.load %arg2[%c0_28, %c48_29] : memref<1x64xf32, #tpu.memory_space<vmem>>, vector<1x16xf32>
    %88 = vector.broadcast %87 : vector<1x16xf32> to vector<16x16xf32>
    %89 = arith.addf %86, %88 : vector<16x16xf32>
    %c0_30 = arith.constant 0 : index
    %c0_31 = arith.constant 0 : index
    %90 = vector.load %arg3[%c0_30, %c0_31] : memref<3x16xf32, #tpu.memory_space<vmem>>, vector<3x16xf32>
    %cst_32 = arith.constant dense<0xFF800000> : vector<16xf32>
    %91 = vector.multi_reduction <maximumf>, %90, %cst_32 [0] : vector<3x16xf32> to vector<16xf32>
    %92 = vector.shape_cast %91 : vector<16xf32> to vector<1x16xf32>
    %93 = vector.broadcast %92 : vector<1x16xf32> to vector<3x16xf32>
    %94 = arith.subf %90, %93 : vector<3x16xf32>
    %95 = math.exp %94 : vector<3x16xf32>
    %cst_33 = arith.constant dense<0.000000e+00> : vector<16xf32>
    %96 = vector.multi_reduction <add>, %95, %cst_33 [0] : vector<3x16xf32> to vector<16xf32>
    %97 = vector.shape_cast %96 : vector<16xf32> to vector<1x16xf32>
    %cst_34 = arith.constant 1.000000e+00 : f32
    %98 = vector.broadcast %cst_34 : f32 to vector<1x16xf32>
    %99 = arith.divf %98, %97 : vector<1x16xf32>
    %100 = vector.broadcast %99 : vector<1x16xf32> to vector<3x16xf32>
    %101 = arith.mulf %95, %100 : vector<3x16xf32>
    %102 = vector.extract_strided_slice %0 {offsets = [0, 48], sizes = [16, 16], strides = [1, 1]} : vector<16x83xf32> to vector<16x16xf32>
    %103 = vector.extract_strided_slice %0 {offsets = [0, 64], sizes = [16, 1], strides = [1, 1]} : vector<16x83xf32> to vector<16x1xf32>
    %104 = vector.broadcast %103 : vector<16x1xf32> to vector<16x16xf32>
    %105 = arith.mulf %102, %104 : vector<16x16xf32>
    %106 = vector.extract_strided_slice %101 {offsets = [2, 0], sizes = [1, 16], strides = [1, 1]} : vector<3x16xf32> to vector<1x16xf32>
    %107 = vector.broadcast %106 : vector<1x16xf32> to vector<16x16xf32>
    %108 = arith.mulf %105, %107 : vector<16x16xf32>
    %c1_i32 = arith.constant 1 : i32
    %109 = tpu.dynamic_rotate %105 by %c1_i32 dim 0 : vector<16x16xf32>, i32 -> vector<16x16xf32>
    %110 = vector.extract_strided_slice %0 {offsets = [0, 81], sizes = [16, 1], strides = [1, 1]} : vector<16x83xf32> to vector<16x1xf32>
    %111 = vector.broadcast %110 : vector<16x1xf32> to vector<16x16xf32>
    %112 = arith.mulf %109, %111 : vector<16x16xf32>
    %113 = vector.extract_strided_slice %101 {offsets = [1, 0], sizes = [1, 16], strides = [1, 1]} : vector<3x16xf32> to vector<1x16xf32>
    %114 = vector.broadcast %113 : vector<1x16xf32> to vector<16x16xf32>
    %115 = arith.mulf %112, %114 : vector<16x16xf32>
    %116 = arith.addf %108, %115 : vector<16x16xf32>
    %c2_i32 = arith.constant 2 : i32
    %117 = tpu.dynamic_rotate %105 by %c2_i32 dim 0 : vector<16x16xf32>, i32 -> vector<16x16xf32>
    %118 = vector.extract_strided_slice %0 {offsets = [0, 82], sizes = [16, 1], strides = [1, 1]} : vector<16x83xf32> to vector<16x1xf32>
    %119 = vector.broadcast %118 : vector<16x1xf32> to vector<16x16xf32>
    %120 = arith.mulf %117, %119 : vector<16x16xf32>
    %121 = vector.extract_strided_slice %101 {offsets = [0, 0], sizes = [1, 16], strides = [1, 1]} : vector<3x16xf32> to vector<1x16xf32>
    %122 = vector.broadcast %121 : vector<1x16xf32> to vector<16x16xf32>
    %123 = arith.mulf %120, %122 : vector<16x16xf32>
    %124 = arith.addf %116, %123 : vector<16x16xf32>
    %c0_35 = arith.constant 0 : index
    %c0_36 = arith.constant 0 : index
    %125 = vector.load %arg4[%c0_35, %c0_36] : memref<16x40xf32, #tpu.memory_space<vmem>>, vector<16x16xf32>
    tpu.vector_store %arg4[%c0_35, %c0_36], %89 {strides = array<i32>} : memref<16x40xf32, #tpu.memory_space<vmem>>, vector<16x16xf32>,
    %c0_37 = arith.constant 0 : index
    %c16 = arith.constant 16 : index
    %126 = vector.load %arg4[%c0_37, %c16] : memref<16x40xf32, #tpu.memory_space<vmem>>, vector<16x16xf32>
    tpu.vector_store %arg4[%c0_37, %c16], %124 {strides = array<i32>} : memref<16x40xf32, #tpu.memory_space<vmem>>, vector<16x16xf32>,
    %cst_38 = arith.constant 0.000000e+00 : f32
    %127 = vector.broadcast %cst_38 : f32 to vector<16x8xf32>
    %128 = vector.extract_strided_slice %83 {offsets = [0, 0], sizes = [16, 8], strides = [1, 1]} : vector<16x16xf32> to vector<16x8xf32>
    %129 = arith.addf %127, %128 : vector<16x8xf32>
    %130 = vector.extract_strided_slice %83 {offsets = [0, 8], sizes = [16, 8], strides = [1, 1]} : vector<16x16xf32> to vector<16x8xf32>
    %131 = arith.addf %129, %130 : vector<16x8xf32>
    %cst_39 = arith.constant 2.500000e-01 : f32
    %132 = vector.broadcast %cst_39 : f32 to vector<16x8xf32>
    %133 = arith.mulf %131, %132 : vector<16x8xf32>
    %c0_40 = arith.constant 0 : index
    %c32 = arith.constant 32 : index
    %134 = vector.load %arg4[%c0_40, %c32] : memref<16x40xf32, #tpu.memory_space<vmem>>, vector<16x8xf32>
    tpu.vector_store %arg4[%c0_40, %c32], %133 {strides = array<i32>} : memref<16x40xf32, #tpu.memory_space<vmem>>, vector<16x8xf32>,
    return
  }
}

</mosaic_0001>

<llo_original>
// kernel: tpu_custom_call.1
$region0: #{tpu_custom_call.1}
  #allocation0 [shape = 'u32[]', space=smem, size = 0x4, offset = 0x4, fixed_abs, tag = 'smem constant byte address 0x4 - core index']
  #allocation1 [shape = 'u32[72,128]{1,0:T(1,128)}', space=vmem, size = 0x9000, scoped, tag = 'internal scratch']
  %s0 = inlined_call_operand.vmem [shape: f32[16,83], index: 0, kind: input, shape index: {}]
  %s1 = inlined_call_operand.vmem [shape: f32[64,48], index: 1, kind: input, shape index: {}]
  %s2 = inlined_call_operand.vmem [shape: f32[1,64], index: 2, kind: input, shape index: {}]
  %s3 = inlined_call_operand.vmem [shape: f32[3,16], index: 3, kind: input, shape index: {}]
  %s4 = inlined_call_operand.hbm [shape: f32[16,40], index: 4, kind: output, shape index: {}]
  %s5 = sld [smem:[#allocation0]]
  $region26: #{tpu_custom_call.1} parent=0
    _
  %s7 = ssub.s32 1, %s5
  %s8 = scalar_select 0, %s7, %s5
  $region1: #{tpu_custom_call.1} parent=0
    #allocation2 [shape = 'u8[8192]{0}', space=vmem, size = 0x2000, scoped, tag = 'output window, operand 0, single buffered']
    #allocation3 [shape = 's32[1]{0}', space=sflag, size = 0x4, scoped, tag = 'scoped memory for tpu_custom_call.1']
    %9 = vsyncpa [#allocation3], 0
    // Predicated region
    $region2: #{tpu_custom_call.1} parent=1 // pred_check
      _
    $region3: #{tpu_custom_call.1} parent=1 // pred_check_branch
      %11 = sbr.rel (0) target = $region5
    $region4: #{tpu_custom_call.1} parent=1 // pred_region
      _
    $region5: #{tpu_custom_call.1} parent=1 // pred_fallthru
      _
    // Predicated region
    $region6: #{tpu_custom_call.1} parent=1 // pred_check
      _
    $region7: #{tpu_custom_call.1} parent=1 // pred_check_branch
      %13 = sbr.rel (0) target = $region9
    $region8: #{tpu_custom_call.1} parent=1 // pred_region
      _
    $region9: #{tpu_custom_call.1} parent=1 // pred_fallthru
      _
    // Predicated region
    $region10: #{tpu_custom_call.1} parent=1 // pred_check
      _
    $region11: #{tpu_custom_call.1} parent=1 // pred_check_branch
      %15 = sbr.rel (0) target = $region13
    $region12: #{tpu_custom_call.1} parent=1 // pred_region
      _
    $region13: #{tpu_custom_call.1} parent=1 // pred_fallthru
      _
    // Predicated region
    $region14: #{tpu_custom_call.1} parent=1 // pred_check
      _
    $region15: #{tpu_custom_call.1} parent=1 // pred_check_branch
      %17 = sbr.rel (0) target = $region17
    $region16: #{tpu_custom_call.1} parent=1 // pred_region
      _
    $region17: #{tpu_custom_call.1} parent=1 // pred_fallthru
      _
    %v18 = vld [vmem:[%s0] sm:$0xff]
    %v19 = vld [vmem:[%s0 + $0x8] sm:$0xff]
    %v20 = vld [vmem:[%s1] sm:$0xff]
    %v21 = vld [vmem:[%s1 + $0x8] sm:$0xff]
    %v22 = vld [vmem:[%s1 + $0x10] sm:$0xff]
    %v23 = vld [vmem:[%s1 + $0x18] sm:$0xff]
    %v24 = vld [vmem:[%s1 + $0x20] sm:$0xff]
    %v25 = vld [vmem:[%s1 + $0x28] sm:$0xff]
    %v26 = vld [vmem:[%s2] sm:$0x1]
    %v28 = vperm.slane %v26, 0
    %vm30 = vcmask 392192
    %v32 = vsel %vm30, %v18, 0
    %v35 = vsel %vm30, %v19, 0
    %37 = vmatpush.msra.mxu0 0.0
    %38 = vmatpush.msra.mxu0 0.0
    %39 = vmatpush.msra.mxu0 0.0
    %40 = vmatpush.msra.mxu0 0.0
    %41 = vmatpush.msra.mxu0 0.0
    %42 = vmatpush.msra.mxu0 0.0
    %43 = vmatpush.msra.mxu0 0.0
    %44 = vmatpush.msra.mxu0 0.0
    %45 = vmatpush.msra.mxu0 0.0
    %46 = vmatpush.msra.mxu0 0.0
    %47 = vmatpush.msra.mxu0 %v25
    %48 = vmatpush.msra.mxu0 %v24
    %49 = vmatpush.msra.mxu0 %v23
    %50 = vmatpush.msra.mxu0 %v22
    %51 = vmatpush.msra.mxu0 %v21
    %52 = vmatpush.msra.mxu0 %v20
    %53 = vmatmul.f32.gmra.mxu0 %v32
    %v54 = vpop.f32.mrf.mxu0
    %v55 = vadd.f32 %v28, %v54
    %56 = vmatmul.f32.gmra.mxu0 %v35
    %v57 = vpop.f32.mrf.mxu0
    %v58 = vadd.f32 %v28, %v57
    %59 = vdwg.mxu0
    %62 = vrot.lane.b32.xlu0 %v55, 112
    %v63 = vpop.permute.xlu0 %62
    %64 = vrot.lane.b32.xlu0 %v58, 112
    %v65 = vpop.permute.xlu0 %64
    %66 = vrot.lane.b32.xlu0 %v18, 63
    %v67 = vpop.permute.xlu0 %66
    %68 = vrot.lane.b32.xlu0 %v19, 63
    %v69 = vpop.permute.xlu0 %68
    %vm72 = vcmask 31744
    %v73 = vsel %vm72, %v55, 0
    %v75 = vsel %vm72, %v58, 0
    %v77 = vsel %vm72, %v63, 0
    %v79 = vsel %vm72, %v65, 0
    %81 = vmatpush.xpose.msra.mxu0 0.0
    %82 = vmatpush.xpose.msra.mxu0 0.0
    %83 = vmatpush.xpose.msra.mxu0 0.0
    %84 = vmatpush.xpose.msra.mxu0 0.0
    %85 = vmatpush.xpose.msra.mxu0 0.0
    %86 = vmatpush.xpose.msra.mxu0 0.0
    %87 = vmatpush.xpose.msra.mxu0 0.0
    %88 = vmatpush.xpose.msra.mxu0 0.0
    %89 = vmatpush.xpose.msra.mxu0 0.0
    %90 = vmatpush.xpose.msra.mxu0 0.0
    %91 = vmatpush.xpose.msra.mxu0 0.0
    %92 = vmatpush.xpose.msra.mxu0 0.0
    %93 = vmatpush.xpose.msra.mxu0 0.0
    %94 = vmatpush.xpose.msra.mxu0 0.0
    %95 = vmatpush.xpose.msra.mxu0 %v79
    %96 = vmatpush.xpose.msra.mxu0 %v77
    %97 = vmatmul.f32.gmra.mxu0 %v73
    %v98 = vpop.f32.mrf.mxu0
    %v99 = vadd.f32 %v67, %v98
    %100 = vmatmul.f32.gmra.mxu0 %v75
    %v101 = vpop.f32.mrf.mxu0
    %v102 = vadd.f32 %v69, %v101
    %103 = vdwg.mxu0
    %vm104 = vcmask 130048
    %v105 = vsel %vm104, %v99, -inf
    %106 = vmax.xlane.f32.xlu0 %v105
    %v107 = vpop.xlane.xlu0 %106
    %v108 = vsel %vm104, %v102, -inf
    %109 = vmax.xlane.f32.xlu0 %v108
    %v110 = vpop.xlane.xlu0 %109
    %v111 = vsub.f32 %v99, %v107
    %v112 = vsub.f32 %v102, %v110
    %v113 = vmul.f32 %v111, 1.442695
    %v114 = vpow.pop %v113
    %v115 = vmul.f32 %v112, 1.442695
    %v116 = vpow.pop %v115
    %v117 = vsel %vm104, %v114, 0.0
    %118 = vadd.xlane.f32.xlu0 %v117
    %v119 = vpop.xlane.xlu0 %118
    %v120 = vsel %vm104, %v116, 0.0
    %121 = vadd.xlane.f32.xlu0 %v120
    %v122 = vpop.xlane.xlu0 %121
    %v123 = vrcp.pop %v119
    %v124 = vmul.f32 %v119, %v123
    %v125 = vsub.f32 1.0, %v124
    %v126 = vmul.f32 %v123, %v125
    %v127 = vadd.f32 %v123, %v126
    %vm128 = vweird.f32 %v119
    %vm129 = vweird.f32 %v123
    %vm130 = vmor %vm128, %vm129
    %v131 = vsel %vm130, %v123, %v127
    %v132 = vand.u32 2147483647, %v119
    %vm133 = vcmp.eq.f32.partialorder %v132, 8.507059e+37
    %v134 = vand.u32 %v119, 2147483648
    %v135 = vor.u32 1.1754944e-38, %v134
    %v136 = vsel %vm133, %v135, %v131
    %v137 = vmul.f32 1.0, %v136
    %v138 = vrcp.pop %v122
    %v139 = vmul.f32 %v122, %v138
    %v140 = vsub.f32 1.0, %v139
    %v141 = vmul.f32 %v138, %v140
    %v142 = vadd.f32 %v138, %v141
    %vm143 = vweird.f32 %v122
    %vm144 = vweird.f32 %v138
    %vm145 = vmor %vm143, %vm144
    %v146 = vsel %vm145, %v138, %v142
    %v147 = vand.u32 2147483647, %v122
    %vm148 = vcmp.eq.f32.partialorder %v147, 8.507059e+37
    %v149 = vand.u32 %v122, 2147483648
    %v150 = vor.u32 1.1754944e-38, %v149
    %v151 = vsel %vm148, %v150, %v146
    %v152 = vmul.f32 1.0, %v151
    %v153 = vmul.f32 %v114, %v137
    %v154 = vmul.f32 %v116, %v152
    %155 = vrot.lane.b32.xlu0 %v55, 96
    %v156 = vpop.permute.xlu0 %155
    %157 = vrot.lane.b32.xlu0 %v58, 96
    %v158 = vpop.permute.xlu0 %157
    %v162 = vsel %vm104, %v153, 0
    %v165 = vsel %vm104, %v154, 0
    %167 = vmatpush.msra.mxu0 0.0
    %168 = vmatpush.msra.mxu0 0.0
    %169 = vmatpush.msra.mxu0 0.0
    %170 = vmatpush.msra.mxu0 0.0
    %171 = vmatpush.msra.mxu0 0.0
    %172 = vmatpush.msra.mxu0 0.0
    %173 = vmatpush.msra.mxu0 0.0
    %174 = vmatpush.msra.mxu0 0.0
    %175 = vmatpush.msra.mxu0 0.0
    %176 = vmatpush.msra.mxu0 0.0
    %177 = vmatpush.msra.mxu0 0.0
    %178 = vmatpush.msra.mxu0 0.0
    %179 = vmatpush.msra.mxu0 0.0
    %180 = vmatpush.msra.mxu0 0.0
    %181 = vmatpush.msra.mxu0 %v158
    %182 = vmatpush.msra.mxu0 %v156
    %183 = vmatmul.f32.gmra.mxu0 %v162
    %v184 = vpop.f32.mrf.mxu0
    %v185 = vadd.f32 0.0, %v184
    %186 = vmatmul.f32.gmra.mxu0 %v165
    %v187 = vpop.f32.mrf.mxu0
    %v188 = vadd.f32 0.0, %v187
    %189 = vdwg.mxu0
    %v190 = vadd.f32 %v153, 0.0
    %v191 = vadd.f32 %v154, 0.0
    %192 = vrot.lane.b32.xlu0 %v55, 124
    %v193 = vpop.permute.xlu0 %192
    %194 = vrot.lane.b32.xlu0 %v58, 124
    %v195 = vpop.permute.xlu0 %194
    %196 = vrot.lane.b32.xlu0 %v55, 108
    %v197 = vpop.permute.xlu0 %196
    %198 = vrot.lane.b32.xlu0 %v58, 108
    %v199 = vpop.permute.xlu0 %198
    %v200 = vsel %vm72, %v193, 0
    %v202 = vsel %vm72, %v195, 0
    %v204 = vsel %vm72, %v197, 0
    %v206 = vsel %vm72, %v199, 0
    %208 = vmatpush.xpose.msra.mxu0 0.0
    %209 = vmatpush.xpose.msra.mxu0 0.0
    %210 = vmatpush.xpose.msra.mxu0 0.0
    %211 = vmatpush.xpose.msra.mxu0 0.0
    %212 = vmatpush.xpose.msra.mxu0 0.0
    %213 = vmatpush.xpose.msra.mxu0 0.0
    %214 = vmatpush.xpose.msra.mxu0 0.0
    %215 = vmatpush.xpose.msra.mxu0 0.0
    %216 = vmatpush.xpose.msra.mxu0 0.0
    %217 = vmatpush.xpose.msra.mxu0 0.0
    %218 = vmatpush.xpose.msra.mxu0 0.0
    %219 = vmatpush.xpose.msra.mxu0 0.0
    %220 = vmatpush.xpose.msra.mxu0 0.0
    %221 = vmatpush.xpose.msra.mxu0 0.0
    %222 = vmatpush.xpose.msra.mxu0 %v206
    %223 = vmatpush.xpose.msra.mxu0 %v204
    %224 = vmatmul.f32.gmra.mxu0 %v200
    %v225 = vpop.f32.mrf.mxu0
    %v226 = vadd.f32 %v67, %v225
    %227 = vmatmul.f32.gmra.mxu0 %v202
    %v228 = vpop.f32.mrf.mxu0
    %v229 = vadd.f32 %v69, %v228
    %230 = vdwg.mxu0
    %v231 = vsel %vm104, %v226, -inf
    %232 = vmax.xlane.f32.xlu0 %v231
    %v233 = vpop.xlane.xlu0 %232
    %v234 = vsel %vm104, %v229, -inf
    %235 = vmax.xlane.f32.xlu0 %v234
    %v236 = vpop.xlane.xlu0 %235
    %v237 = vsub.f32 %v226, %v233
    %v238 = vsub.f32 %v229, %v236
    %v239 = vmul.f32 %v237, 1.442695
    %v240 = vpow.pop %v239
    %v241 = vmul.f32 %v238, 1.442695
    %v242 = vpow.pop %v241
    %v243 = vsel %vm104, %v240, 0.0
    %244 = vadd.xlane.f32.xlu0 %v243
    %v245 = vpop.xlane.xlu0 %244
    %v246 = vsel %vm104, %v242, 0.0
    %247 = vadd.xlane.f32.xlu0 %v246
    %v248 = vpop.xlane.xlu0 %247
    %v249 = vrcp.pop %v245
    %v250 = vmul.f32 %v245, %v249
    %v251 = vsub.f32 1.0, %v250
    %v252 = vmul.f32 %v249, %v251
    %v253 = vadd.f32 %v249, %v252
    %vm254 = vweird.f32 %v245
    %vm255 = vweird.f32 %v249
    %vm256 = vmor %vm254, %vm255
    %v257 = vsel %vm256, %v249, %v253
    %v258 = vand.u32 2147483647, %v245
    %vm259 = vcmp.eq.f32.partialorder %v258, 8.507059e+37
    %v260 = vand.u32 %v245, 2147483648
    %v261 = vor.u32 1.1754944e-38, %v260
    %v262 = vsel %vm259, %v261, %v257
    %v263 = vmul.f32 1.0, %v262
    %v264 = vrcp.pop %v248
    %v265 = vmul.f32 %v248, %v264
    %v266 = vsub.f32 1.0, %v265
    %v267 = vmul.f32 %v264, %v266
    %v268 = vadd.f32 %v264, %v267
    %vm269 = vweird.f32 %v248
    %vm270 = vweird.f32 %v264
    %vm271 = vmor %vm269, %vm270
    %v272 = vsel %vm271, %v264, %v268
    %v273 = vand.u32 2147483647, %v248
    %vm274 = vcmp.eq.f32.partialorder %v273, 8.507059e+37
    %v275 = vand.u32 %v248, 2147483648
    %v276 = vor.u32 1.1754944e-38, %v275
    %v277 = vsel %vm274, %v276, %v272
    %v278 = vmul.f32 1.0, %v277
    %v279 = vmul.f32 %v240, %v263
    %v280 = vmul.f32 %v242, %v278
    %281 = vrot.lane.b32.xlu0 %v55, 92
    %v282 = vpop.permute.xlu0 %281
    %283 = vrot.lane.b32.xlu0 %v58, 92
    %v284 = vpop.permute.xlu0 %283
    %v288 = vsel %vm104, %v279, 0
    %v291 = vsel %vm104, %v280, 0
    %293 = vmatpush.msra.mxu0 0.0
    %294 = vmatpush.msra.mxu0 0.0
    %295 = vmatpush.msra.mxu0 0.0
    %296 = vmatpush.msra.mxu0 0.0
    %297 = vmatpush.msra.mxu0 0.0
    %298 = vmatpush.msra.mxu0 0.0
    %299 = vmatpush.msra.mxu0 0.0
    %300 = vmatpush.msra.mxu0 0.0
    %301 = vmatpush.msra.mxu0 0.0
    %302 = vmatpush.msra.mxu0 0.0
    %303 = vmatpush.msra.mxu0 0.0
    %304 = vmatpush.msra.mxu0 0.0
    %305 = vmatpush.msra.mxu0 0.0
    %306 = vmatpush.msra.mxu0 0.0
    %307 = vmatpush.msra.mxu0 %v284
    %308 = vmatpush.msra.mxu0 %v282
    %309 = vmatmul.f32.gmra.mxu0 %v288
    %v310 = vpop.f32.mrf.mxu0
    %v311 = vadd.f32 0.0, %v310
    %312 = vmatmul.f32.gmra.mxu0 %v291
    %v313 = vpop.f32.mrf.mxu0
    %v314 = vadd.f32 0.0, %v313
    %315 = vdwg.mxu0
    %v316 = vadd.f32 %v190, %v279
    %v317 = vadd.f32 %v191, %v280
    %318 = vrot.lane.b32.xlu0 %v55, 120
    %v319 = vpop.permute.xlu0 %318
    %320 = vrot.lane.b32.xlu0 %v58, 120
    %v321 = vpop.permute.xlu0 %320
    %322 = vrot.lane.b32.xlu0 %v55, 104
    %v323 = vpop.permute.xlu0 %322
    %324 = vrot.lane.b32.xlu0 %v58, 104
    %v325 = vpop.permute.xlu0 %324
    %v326 = vsel %vm72, %v319, 0
    %v328 = vsel %vm72, %v321, 0
    %v330 = vsel %vm72, %v323, 0
    %v332 = vsel %vm72, %v325, 0
    %334 = vmatpush.xpose.msra.mxu0 0.0
    %335 = vmatpush.xpose.msra.mxu0 0.0
    %336 = vmatpush.xpose.msra.mxu0 0.0
    %337 = vmatpush.xpose.msra.mxu0 0.0
    %338 = vmatpush.xpose.msra.mxu0 0.0
    %339 = vmatpush.xpose.msra.mxu0 0.0
    %340 = vmatpush.xpose.msra.mxu0 0.0
    %341 = vmatpush.xpose.msra.mxu0 0.0
    %342 = vmatpush.xpose.msra.mxu0 0.0
    %343 = vmatpush.xpose.msra.mxu0 0.0
    %344 = vmatpush.xpose.msra.mxu0 0.0
    %345 = vmatpush.xpose.msra.mxu0 0.0
    %346 = vmatpush.xpose.msra.mxu0 0.0
    %347 = vmatpush.xpose.msra.mxu0 0.0
    %348 = vmatpush.xpose.msra.mxu0 %v332
    %349 = vmatpush.xpose.msra.mxu0 %v330
    %350 = vmatmul.f32.gmra.mxu0 %v326
    %v351 = vpop.f32.mrf.mxu0
    %v352 = vadd.f32 %v67, %v351
    %353 = vmatmul.f32.gmra.mxu0 %v328
    %v354 = vpop.f32.mrf.mxu0
    %v355 = vadd.f32 %v69, %v354
    %356 = vdwg.mxu0
    %v357 = vsel %vm104, %v352, -inf
    %358 = vmax.xlane.f32.xlu0 %v357
    %v359 = vpop.xlane.xlu0 %358
    %v360 = vsel %vm104, %v355, -inf
    %361 = vmax.xlane.f32.xlu0 %v360
    %v362 = vpop.xlane.xlu0 %361
    %v363 = vsub.f32 %v352, %v359
    %v364 = vsub.f32 %v355, %v362
    %v365 = vmul.f32 %v363, 1.442695
    %v366 = vpow.pop %v365
    %v367 = vmul.f32 %v364, 1.442695
    %v368 = vpow.pop %v367
    %v369 = vsel %vm104, %v366, 0.0
    %370 = vadd.xlane.f32.xlu0 %v369
    %v371 = vpop.xlane.xlu0 %370
    %v372 = vsel %vm104, %v368, 0.0
    %373 = vadd.xlane.f32.xlu0 %v372
    %v374 = vpop.xlane.xlu0 %373
    %v375 = vrcp.pop %v371
    %v376 = vmul.f32 %v371, %v375
    %v377 = vsub.f32 1.0, %v376
    %v378 = vmul.f32 %v375, %v377
    %v379 = vadd.f32 %v375, %v378
    %vm380 = vweird.f32 %v371
    %vm381 = vweird.f32 %v375
    %vm382 = vmor %vm380, %vm381
    %v383 = vsel %vm382, %v375, %v379
    %v384 = vand.u32 2147483647, %v371
    %vm385 = vcmp.eq.f32.partialorder %v384, 8.507059e+37
    %v386 = vand.u32 %v371, 2147483648
    %v387 = vor.u32 1.1754944e-38, %v386
    %v388 = vsel %vm385, %v387, %v383
    %v389 = vmul.f32 1.0, %v388
    %v390 = vrcp.pop %v374
    %v391 = vmul.f32 %v374, %v390
    %v392 = vsub.f32 1.0, %v391
    %v393 = vmul.f32 %v390, %v392
    %v394 = vadd.f32 %v390, %v393
    %vm395 = vweird.f32 %v374
    %vm396 = vweird.f32 %v390
    %vm397 = vmor %vm395, %vm396
    %v398 = vsel %vm397, %v390, %v394
    %v399 = vand.u32 2147483647, %v374
    %vm400 = vcmp.eq.f32.partialorder %v399, 8.507059e+37
    %v401 = vand.u32 %v374, 2147483648
    %v402 = vor.u32 1.1754944e-38, %v401
    %v403 = vsel %vm400, %v402, %v398
    %v404 = vmul.f32 1.0, %v403
    %v405 = vmul.f32 %v366, %v389
    %v406 = vmul.f32 %v368, %v404
    %407 = vrot.lane.b32.xlu0 %v55, 88
    %v408 = vpop.permute.xlu0 %407
    %409 = vrot.lane.b32.xlu0 %v58, 88
    %v410 = vpop.permute.xlu0 %409
    %v414 = vsel %vm104, %v405, 0
    %v417 = vsel %vm104, %v406, 0
    %419 = vmatpush.msra.mxu0 0.0
    %420 = vmatpush.msra.mxu0 0.0
    %421 = vmatpush.msra.mxu0 0.0
    %422 = vmatpush.msra.mxu0 0.0
    %423 = vmatpush.msra.mxu0 0.0
    %424 = vmatpush.msra.mxu0 0.0
    %425 = vmatpush.msra.mxu0 0.0
    %426 = vmatpush.msra.mxu0 0.0
    %427 = vmatpush.msra.mxu0 0.0
    %428 = vmatpush.msra.mxu0 0.0
    %429 = vmatpush.msra.mxu0 0.0
    %430 = vmatpush.msra.mxu0 0.0
    %431 = vmatpush.msra.mxu0 0.0
    %432 = vmatpush.msra.mxu0 0.0
    %433 = vmatpush.msra.mxu0 %v410
    %434 = vmatpush.msra.mxu0 %v408
    %435 = vmatmul.f32.gmra.mxu0 %v414
    %v436 = vpop.f32.mrf.mxu0
    %v437 = vadd.f32 0.0, %v436
    %438 = vmatmul.f32.gmra.mxu0 %v417
    %v439 = vpop.f32.mrf.mxu0
    %v440 = vadd.f32 0.0, %v439
    %441 = vdwg.mxu0
    %v442 = vadd.f32 %v316, %v405
    %v443 = vadd.f32 %v317, %v406
    %444 = vrot.lane.b32.xlu0 %v55, 116
    %v445 = vpop.permute.xlu0 %444
    %446 = vrot.lane.b32.xlu0 %v58, 116
    %v447 = vpop.permute.xlu0 %446
    %448 = vrot.lane.b32.xlu0 %v55, 100
    %v449 = vpop.permute.xlu0 %448
    %450 = vrot.lane.b32.xlu0 %v58, 100
    %v451 = vpop.permute.xlu0 %450
    %v452 = vsel %vm72, %v445, 0
    %v454 = vsel %vm72, %v447, 0
    %v456 = vsel %vm72, %v449, 0
    %v458 = vsel %vm72, %v451, 0
    %460 = vmatpush.xpose.msra.mxu0 0.0
    %461 = vmatpush.xpose.msra.mxu0 0.0
    %462 = vmatpush.xpose.msra.mxu0 0.0
    %463 = vmatpush.xpose.msra.mxu0 0.0
    %464 = vmatpush.xpose.msra.mxu0 0.0
    %465 = vmatpush.xpose.msra.mxu0 0.0
    %466 = vmatpush.xpose.msra.mxu0 0.0
    %467 = vmatpush.xpose.msra.mxu0 0.0
    %468 = vmatpush.xpose.msra.mxu0 0.0
    %469 = vmatpush.xpose.msra.mxu0 0.0
    %470 = vmatpush.xpose.msra.mxu0 0.0
    %471 = vmatpush.xpose.msra.mxu0 0.0
    %472 = vmatpush.xpose.msra.mxu0 0.0
    %473 = vmatpush.xpose.msra.mxu0 0.0
    %474 = vmatpush.xpose.msra.mxu0 %v458
    %475 = vmatpush.xpose.msra.mxu0 %v456
    %476 = vmatmul.f32.gmra.mxu0 %v452
    %v477 = vpop.f32.mrf.mxu0
    %v478 = vadd.f32 %v67, %v477
    %479 = vmatmul.f32.gmra.mxu0 %v454
    %v480 = vpop.f32.mrf.mxu0
    %v481 = vadd.f32 %v69, %v480
    %482 = vdwg.mxu0
    %v483 = vsel %vm104, %v478, -inf
    %484 = vmax.xlane.f32.xlu0 %v483
    %v485 = vpop.xlane.xlu0 %484
    %v486 = vsel %vm104, %v481, -inf
    %487 = vmax.xlane.f32.xlu0 %v486
    %v488 = vpop.xlane.xlu0 %487
    %v489 = vsub.f32 %v478, %v485
    %v490 = vsub.f32 %v481, %v488
    %v491 = vmul.f32 %v489, 1.442695
    %v492 = vpow.pop %v491
    %v493 = vmul.f32 %v490, 1.442695
    %v494 = vpow.pop %v493
    %v495 = vsel %vm104, %v492, 0.0
    %496 = vadd.xlane.f32.xlu0 %v495
    %v497 = vpop.xlane.xlu0 %496
    %v498 = vsel %vm104, %v494, 0.0
    %499 = vadd.xlane.f32.xlu0 %v498
    %v500 = vpop.xlane.xlu0 %499
    %v501 = vrcp.pop %v497
    %v502 = vmul.f32 %v497, %v501
    %v503 = vsub.f32 1.0, %v502
    %v504 = vmul.f32 %v501, %v503
    %v505 = vadd.f32 %v501, %v504
    %vm506 = vweird.f32 %v497
    %vm507 = vweird.f32 %v501
    %vm508 = vmor %vm506, %vm507
    %v509 = vsel %vm508, %v501, %v505
    %v510 = vand.u32 2147483647, %v497
    %vm511 = vcmp.eq.f32.partialorder %v510, 8.507059e+37
    %v512 = vand.u32 %v497, 2147483648
    %v513 = vor.u32 1.1754944e-38, %v512
    %v514 = vsel %vm511, %v513, %v509
    %v515 = vmul.f32 1.0, %v514
    %v516 = vrcp.pop %v500
    %v517 = vmul.f32 %v500, %v516
    %v518 = vsub.f32 1.0, %v517
    %v519 = vmul.f32 %v516, %v518
    %v520 = vadd.f32 %v516, %v519
    %vm521 = vweird.f32 %v500
    %vm522 = vweird.f32 %v516
    %vm523 = vmor %vm521, %vm522
    %v524 = vsel %vm523, %v516, %v520
    %v525 = vand.u32 2147483647, %v500
    %vm526 = vcmp.eq.f32.partialorder %v525, 8.507059e+37
    %v527 = vand.u32 %v500, 2147483648
    %v528 = vor.u32 1.1754944e-38, %v527
    %v529 = vsel %vm526, %v528, %v524
    %v530 = vmul.f32 1.0, %v529
    %v531 = vmul.f32 %v492, %v515
    %v532 = vmul.f32 %v494, %v530
    %533 = vrot.lane.b32.xlu0 %v55, 84
    %v534 = vpop.permute.xlu0 %533
    %535 = vrot.lane.b32.xlu0 %v58, 84
    %v536 = vpop.permute.xlu0 %535
    %v540 = vsel %vm104, %v531, 0
    %v543 = vsel %vm104, %v532, 0
    %545 = vmatpush.msra.mxu0 0.0
    %546 = vmatpush.msra.mxu0 0.0
    %547 = vmatpush.msra.mxu0 0.0
    %548 = vmatpush.msra.mxu0 0.0
    %549 = vmatpush.msra.mxu0 0.0
    %550 = vmatpush.msra.mxu0 0.0
    %551 = vmatpush.msra.mxu0 0.0
    %552 = vmatpush.msra.mxu0 0.0
    %553 = vmatpush.msra.mxu0 0.0
    %554 = vmatpush.msra.mxu0 0.0
    %555 = vmatpush.msra.mxu0 0.0
    %556 = vmatpush.msra.mxu0 0.0
    %557 = vmatpush.msra.mxu0 0.0
    %558 = vmatpush.msra.mxu0 0.0
    %559 = vmatpush.msra.mxu0 %v536
    %560 = vmatpush.msra.mxu0 %v534
    %561 = vmatmul.f32.gmra.mxu0 %v540
    %v562 = vpop.f32.mrf.mxu0
    %v563 = vadd.f32 0.0, %v562
    %564 = vmatmul.f32.gmra.mxu0 %v543
    %v565 = vpop.f32.mrf.mxu0
    %v566 = vadd.f32 0.0, %v565
    %567 = vdwg.mxu0
    %v568 = vadd.f32 %v442, %v531
    %v569 = vadd.f32 %v443, %v532
    %572 = vrot.lane.b32.xlu0 %v311, 4
    %v573 = vpop.permute.xlu0 %572
    %574 = vrot.lane.b32.xlu0 %v314, 4
    %v575 = vpop.permute.xlu0 %574
    %580 = vrot.lane.b32.xlu0 %v437, 8
    %v581 = vpop.permute.xlu0 %580
    %582 = vrot.lane.b32.xlu0 %v440, 8
    %v583 = vpop.permute.xlu0 %582
    %588 = vrot.lane.b32.xlu0 %v563, 12
    %v589 = vpop.permute.xlu0 %588
    %590 = vrot.lane.b32.xlu0 %v566, 12
    %v591 = vpop.permute.xlu0 %590
    %v594 = vsel %vm72, %v185, %v573
    %v595 = vsel %vm72, %v188, %v575
    %vm596 = vcmask 64512
    %v597 = vsel %vm596, %v594, %v581
    %v598 = vsel %vm596, %v595, %v583
    %vm599 = vcmask 97280
    %v600 = vsel %vm599, %v597, %v589
    %v601 = vsel %vm599, %v598, %v591
    %v602 = vld [vmem:[%s1 + $0x30] sm:$0xff]
    %v603 = vld [vmem:[%s1 + $0x38] sm:$0xff]
    %604 = vrot.lane.b32.xlu0 %v28, 80
    %v605 = vpop.permute.xlu0 %604
    %v608 = vsel %vm104, %v600, 0
    %v611 = vsel %vm104, %v601, 0
    %613 = vmatpush.msra.mxu0 0.0
    %614 = vmatpush.msra.mxu0 0.0
    %615 = vmatpush.msra.mxu0 0.0
    %616 = vmatpush.msra.mxu0 0.0
    %617 = vmatpush.msra.mxu0 0.0
    %618 = vmatpush.msra.mxu0 0.0
    %619 = vmatpush.msra.mxu0 0.0
    %620 = vmatpush.msra.mxu0 0.0
    %621 = vmatpush.msra.mxu0 0.0
    %622 = vmatpush.msra.mxu0 0.0
    %623 = vmatpush.msra.mxu0 0.0
    %624 = vmatpush.msra.mxu0 0.0
    %625 = vmatpush.msra.mxu0 0.0
    %626 = vmatpush.msra.mxu0 0.0
    %627 = vmatpush.msra.mxu0 %v603
    %628 = vmatpush.msra.mxu0 %v602
    %629 = vmatmul.f32.gmra.mxu0 %v608
    %v630 = vpop.f32.mrf.mxu0
    %v631 = vadd.f32 %v605, %v630
    %632 = vmatmul.f32.gmra.mxu0 %v611
    %v633 = vpop.f32.mrf.mxu0
    %v634 = vadd.f32 %v605, %v633
    %635 = vdwg.mxu0
    %v636 = vld [vmem:[%s3] sm:$0x7]
    %vm637 = vcmask 124928
    %v638 = vsel %vm637, %v636, -inf
    %v639 = vrot.slane %v638, 4
    %v640 = vmax.f32 %v638, %v639
    %v641 = vrot.slane %v640, 2
    %v642 = vmax.f32 %v640, %v641
    %v643 = vrot.slane %v642, 1
    %v644 = vmax.f32 %v642, %v643
    %v645 = vsub.f32 %v636, %v644
    %v646 = vmul.f32 %v645, 1.442695
    %v647 = vpow.pop %v646
    %v648 = vsel %vm637, %v647, 0.0
    %v649 = vrot.slane %v648, 4
    %v650 = vadd.f32 %v648, %v649
    %v651 = vrot.slane %v650, 2
    %v652 = vadd.f32 %v650, %v651
    %v653 = vrot.slane %v652, 1
    %v654 = vadd.f32 %v652, %v653
    %v655 = vrcp.pop %v654
    %v656 = vmul.f32 %v654, %v655
    %v657 = vsub.f32 1.0, %v656
    %v658 = vmul.f32 %v655, %v657
    %v659 = vadd.f32 %v655, %v658
    %vm660 = vweird.f32 %v654
    %vm661 = vweird.f32 %v655
    %vm662 = vmor %vm660, %vm661
    %v663 = vsel %vm662, %v655, %v659
    %v664 = vand.u32 2147483647, %v654
    %vm665 = vcmp.eq.f32.partialorder %v664, 8.507059e+37
    %v666 = vand.u32 %v654, 2147483648
    %v667 = vor.u32 1.1754944e-38, %v666
    %v668 = vsel %vm665, %v667, %v663
    %v669 = vmul.f32 1.0, %v668
    %v670 = vmul.f32 %v647, %v669
    %671 = vset.pattern.permute.xlu0 64
    %672 = vperm.xlu0 %671, %v18
    %v673 = vpop.permute.xlu0 %672
    %675 = vset.pattern.permute.xlu0 64
    %676 = vperm.xlu0 %675, %v19
    %v677 = vpop.permute.xlu0 %676
    %v679 = vmul.f32 %v18, %v673
    %v680 = vmul.f32 %v19, %v677
    %v681 = vperm.slane %v670, 2
    %683 = vrot.lane.b32.xlu0 %v681, 48
    %v684 = vpop.permute.xlu0 %683
    %v686 = vmul.f32 %v679, %v684
    %v687 = vmul.f32 %v680, %v684
    %690 = vrot.lane.b32.xlu0 %v679, 80
    %v691 = vpop.permute.xlu0 %690
    %692 = vrot.lane.b32.xlu0 %v680, 80
    %v693 = vpop.permute.xlu0 %692
    %v696 = vrot.slane %v691, 7
    %v697 = vrot.slane %v693, 7
    %v698 = vlaneseq
    %v699 = vshrl.u32 %v698, 7
    %vm700 = vcmp.lt.s32.totalorder %v699, 1
    %v701 = vsel %vm700, %v696, %v697
    %v702 = vsel %vm700, %v697, %v696
    %703 = vset.pattern.permute.xlu0 81
    %704 = vperm.xlu0 %703, %v18
    %v705 = vpop.permute.xlu0 %704
    %707 = vset.pattern.permute.xlu0 81
    %708 = vperm.xlu0 %707, %v19
    %v709 = vpop.permute.xlu0 %708
    %v711 = vmul.f32 %v702, %v705
    %v712 = vmul.f32 %v701, %v709
    %v713 = vperm.slane %v670, 1
    %v714 = vmul.f32 %v711, %v713
    %v715 = vmul.f32 %v712, %v713
    %718 = vrot.lane.b32.xlu0 %v714, 48
    %v719 = vpop.permute.xlu0 %718
    %720 = vrot.lane.b32.xlu0 %v715, 48
    %v721 = vpop.permute.xlu0 %720
    %v724 = vadd.f32 %v686, %v719
    %v725 = vadd.f32 %v687, %v721
    %v726 = vrot.slane %v691, 6
    %v727 = vrot.slane %v693, 6
    %vm728 = vcmp.lt.s32.totalorder %v699, 2
    %v729 = vsel %vm728, %v726, %v727
    %v730 = vsel %vm728, %v727, %v726
    %731 = vset.pattern.permute.xlu0 82
    %732 = vperm.xlu0 %731, %v18
    %v733 = vpop.permute.xlu0 %732
    %735 = vset.pattern.permute.xlu0 82
    %736 = vperm.xlu0 %735, %v19
    %v737 = vpop.permute.xlu0 %736
    %v739 = vmul.f32 %v730, %v733
    %v740 = vmul.f32 %v729, %v737
    %v741 = vperm.slane %v670, 0
    %v742 = vmul.f32 %v739, %v741
    %v743 = vmul.f32 %v740, %v741
    %746 = vrot.lane.b32.xlu0 %v742, 48
    %v747 = vpop.permute.xlu0 %746
    %748 = vrot.lane.b32.xlu0 %v743, 48
    %v749 = vpop.permute.xlu0 %748
    %v752 = vadd.f32 %v724, %v747
    %v753 = vadd.f32 %v725, %v749
    %754 = vst.msk [vmem:[#allocation2] sm:$0xff] %vm104, %v631
    %755 = vst.msk [vmem:[#allocation2 + $0x8] sm:$0xff] %vm104, %v634
    %758 = vrot.lane.b32.xlu0 %v752, 96
    %v759 = vpop.permute.xlu0 %758
    %760 = vrot.lane.b32.xlu0 %v753, 96
    %v761 = vpop.permute.xlu0 %760
    %vm764 = vcmask 261248
    %765 = vst.msk [vmem:[#allocation2] sm:$0xff] %vm764, %v759
    %766 = vst.msk [vmem:[#allocation2 + $0x8] sm:$0xff] %vm764, %v761
    %v767 = vadd.f32 %v568, 0.0
    %v768 = vadd.f32 %v569, 0.0
    %771 = vrot.lane.b32.xlu0 %v568, 120
    %v772 = vpop.permute.xlu0 %771
    %773 = vrot.lane.b32.xlu0 %v569, 120
    %v774 = vpop.permute.xlu0 %773
    %v777 = vadd.f32 %v767, %v772
    %v778 = vadd.f32 %v768, %v774
    %v779 = vmul.f32 %v777, 0.25
    %v780 = vmul.f32 %v778, 0.25
    %783 = vrot.lane.b32.xlu0 %v779, 32
    %v784 = vpop.permute.xlu0 %783
    %785 = vrot.lane.b32.xlu0 %v780, 32
    %v786 = vpop.permute.xlu0 %785
    %vm789 = vcmask 326912
    %790 = vst.msk [vmem:[#allocation2] sm:$0xff] %vm789, %v784
    %791 = vst.msk [vmem:[#allocation2 + $0x8] sm:$0xff] %vm789, %v786
    // Predicated region
    $region18: #{tpu_custom_call.1} parent=1 // pred_check
      _
    $region19: #{tpu_custom_call.1} parent=1 // pred_check_branch
      %793 = sbr.rel (0) target = $region21
    $region20: #{tpu_custom_call.1} parent=1 // pred_region
      %795 = vsyncadd [#allocation3], 0
      %s796 = sshll.u32 [#allocation2], 4
      %s797 = int_to_ptr.vmem [resolvable:$true] %s796
      %s798 = sshll.u32 %s4, 4
      %s799 = int_to_ptr.hbm [resolvable:$true] %s798
      %804 = dma.vmem_to_hbm [thread:$0]  %s797, 256, %s799, [#allocation3], 128, 128, 8
    $region21: #{tpu_custom_call.1} parent=1 // pred_fallthru
      _
    // Predicated region
    $region22: #{tpu_custom_call.1} parent=1 // pred_check
      _
    $region23: #{tpu_custom_call.1} parent=1 // pred_check_branch
      %806 = sbr.rel (0) target = $region25
    $region24: #{tpu_custom_call.1} parent=1 // pred_region
      %808 = dma.done [#allocation3], 256
    $region25: #{tpu_custom_call.1} parent=1 // pred_fallthru
      _
    %809 = vsyncpa [#allocation3], 1

</llo_original>
